<compile_context>
chip_gen: v7x
topology: tpu7x:2x2x1
jax: 0.10.0
libtpu: 0.0.40
codegen_flags: <defaults>
</compile_context>

<pallas_src>
import functools

import jax
import jax.numpy as jnp
from jax.experimental import pallas as pl
from jax.experimental.pallas import tpu as pltpu

HIDDEN = 64
IN_DIM = 3        # cat([x (N,2), t (N,1)], dim=1)
IN_PAD = 8        # layer-1 K zero-padded to a full sublane tile for the MXU
X_DIM = 2
OUT_DIM = 2
MAX_TILE_B = 16384   # VMEM-safe on every generation (incl. v7x's 64 MiB)


def _round_up(a, b):
    return (a + b - 1) // b * b


def _cdiv(a, b):
    return (a + b - 1) // b


def _mlp_kernel(inp_ref, w1_ref, b1_ref, w2_ref, b2_ref, w3_ref, b3_ref,
                out_ref, *, act_dtype):
    # Feature-major: every activation is (features, TB); TB is lane-dense.
    h0 = inp_ref[...].astype(act_dtype)                        # (8, TB)

    # Layer 1: (64,8)@(8,TB) on the MXU (K zero-padded 3 -> 8), f32 accumulate.
    pre1 = jnp.dot(w1_ref[...], h0,
                   preferred_element_type=jnp.float32) + b1_ref[...]
    h1 = jnp.tanh(pre1.astype(act_dtype))                      # (64, TB) EUP

    # Layer 2: (64,64)@(64,TB) on the MXU.
    pre2 = jnp.dot(w2_ref[...], h1,
                   preferred_element_type=jnp.float32) + b2_ref[...]
    h2 = jnp.tanh(pre2.astype(act_dtype))                      # (64, TB) EUP

    # Layer 3: (2,64)@(64,TB) -> (2,TB); store is lane-dense along batch.
    y = jnp.dot(w3_ref[...], h2,
                preferred_element_type=jnp.float32) + b3_ref[...]
    out_ref[...] = y.astype(out_ref.dtype)


def _default_use_bf16():
    # bf16 EUP/MXU pays off on v6e / v7x; keep f32 on v5e and older chips.
    try:
        kind = jax.devices()[0].device_kind.lower()
    except Exception:
        return False
    return not any(v in kind for v in ("v2", "v3", "v4", "v5"))


@functools.partial(jax.jit, static_argnames=("tile_b", "use_bf16"))
def _forward(x, t, params, *, tile_b, use_bf16):
    w1, b1, w2, b2, w3, b3 = params      # PyTorch layout: w (out,in), b (out,)
    n = x.shape[0]
    act_dtype = jnp.bfloat16 if use_bf16 else jnp.float32

    # ---- batch tiling: pad only to the next 128 multiple, then balance tiles.
    n128 = _round_up(n, 128)
    tb_cap = max(128, (min(tile_b, MAX_TILE_B) // 128) * 128)   # clamp + 128-align
    g = _cdiv(n128, tb_cap)
    if g == 1 and n128 >= 256:
        g = 2                           # give the 2nd TensorCore (v7x) work
    tb = _round_up(_cdiv(n128, g), 128)
    n_pad = g * tb                      # waste is < 128 cols per grid step

    # ---- fused concat + transpose + pad into a single (8, n_pad) f32 slab.
    inp_fm = jnp.pad(
        jnp.concatenate([x, t], axis=1).T.astype(jnp.float32),
        ((0, IN_PAD - IN_DIM), (0, n_pad - n)),
    )

    # Weights in the kernel compute dtype; biases stay f32 columns (broadcast
    # against the (F, TB) f32 accumulators).
    w1p = jnp.pad(w1, ((0, 0), (0, IN_PAD - IN_DIM))).astype(act_dtype)  # (64,8)
    w2c = w2.astype(act_dtype)                                           # (64,64)
    w3c = w3.astype(act_dtype)                                           # (2,64)
    b1c = b1.reshape(HIDDEN, 1).astype(jnp.float32)
    b2c = b2.reshape(HIDDEN, 1).astype(jnp.float32)
    b3c = b3.reshape(OUT_DIM, 1).astype(jnp.float32)

    # Weights/biases map to block (0, 0) every step -> resident in VMEM.
    full = lambda shape: pl.BlockSpec(shape, lambda i: (0, 0))

    out_fm = pl.pallas_call(
        functools.partial(_mlp_kernel, act_dtype=act_dtype),
        out_shape=jax.ShapeDtypeStruct((OUT_DIM, n_pad), jnp.float32),
        grid_spec=pltpu.PrefetchScalarGridSpec(
            num_scalar_prefetch=0,
            grid=(g,),
            in_specs=[
                pl.BlockSpec((IN_PAD, tb), lambda i: (0, i)),   # input (8, TB)
                full((HIDDEN, IN_PAD)),                         # w1 (64, 8)
                full((HIDDEN, 1)),                              # b1 (64, 1)
                full((HIDDEN, HIDDEN)),                         # w2 (64, 64)
                full((HIDDEN, 1)),                              # b2 (64, 1)
                full((OUT_DIM, HIDDEN)),                        # w3 (2, 64)
                full((OUT_DIM, 1)),                             # b3 (2, 1)
            ],
            out_specs=pl.BlockSpec((OUT_DIM, tb), lambda i: (0, i)),
        ),
        compiler_params=pltpu.CompilerParams(
            # Batch tiles are independent -> megacore sharding on v7x.
            dimension_semantics=("parallel",),
            # Headroom for the largest tile; still well under v7x's 64 MiB.
            vmem_limit_bytes=48 * 1024 * 1024,
        ),
    )(inp_fm, w1p, b1c, w2c, b2c, w3c, b3c)

    # TODO(synk): if the caller can consume feature-major (2, N) arrays, return
    # out_fm[:, :n] directly and skip this slice + transpose.
    return out_fm[:, :n].T               # back to batch-major (N, 2)


def vector_field_forward(x, t, params, *, tile_b=8192, use_bf16=None):
    """x: (N, 2) float32, t: (N, 1) float32 -> (N, 2) float32."""
    if t.ndim == 1:
        t = t.reshape(-1, 1)
    if use_bf16 is None:
        use_bf16 = _default_use_bf16()
    return _forward(x, t, params, tile_b=int(tile_b), use_bf16=bool(use_bf16))


def init_params(key):
    """nn.Linear-style init, PyTorch (out_features, in_features) weight layout."""
    ks = jax.random.split(key, 6)

    def linear(kw, kb, fan_in, fan_out):
        bound = 1.0 / jnp.sqrt(float(fan_in))
        w = jax.random.uniform(kw, (fan_out, fan_in), jnp.float32, -bound, bound)
        b = jax.random.uniform(kb, (fan_out,), jnp.float32, -bound, bound)
        return w, b

    w1, b1 = linear(ks[0], ks[1], IN_DIM, HIDDEN)
    w2, b2 = linear(ks[2], ks[3], HIDDEN, HIDDEN)
    w3, b3 = linear(ks[4], ks[5], HIDDEN, OUT_DIM)
    return (w1, b1, w2, b2, w3, b3)


def reference_forward(x, t, params):
    w1, b1, w2, b2, w3, b3 = params
    inp = jnp.concatenate([x, t], axis=1)
    h1 = jnp.tanh(inp @ w1.T + b1)
    h2 = jnp.tanh(h1 @ w2.T + b2)
    return h2 @ w3.T + b3


if __name__ == "__main__":
    key = jax.random.PRNGKey(0)
    kp, kx, kt = jax.random.split(key, 3)
    params = init_params(kp)

    # 1) Small batch, f32 path: exact agreement with the f32 reference.
    N = 32
    x = jax.random.normal(kx, (N, 2), jnp.float32)
    t = jax.random.uniform(kt, (N, 1), jnp.float32)
    out = jax.block_until_ready(vector_field_forward(x, t, params, use_bf16=False))
    ref = reference_forward(x, t, params)
    assert out.shape == (N, OUT_DIM)
    assert jnp.allclose(out, ref, atol=1e-5, rtol=1e-5), "f32 mismatch vs reference"

    # 2) Ragged batch, multi-tile grid (exercises padding + tiling), still f32.
    N2 = 200
    x2 = jax.random.normal(kx, (N2, 2), jnp.float32)
    t2 = jax.random.uniform(kt, (N2, 1), jnp.float32)
    out2 = jax.block_until_ready(
        vector_field_forward(x2, t2, params, tile_b=128, use_bf16=False))
    ref2 = reference_forward(x2, t2, params)
    assert out2.shape == (N2, OUT_DIM)
    assert jnp.allclose(out2, ref2, atol=1e-5, rtol=1e-5), "padded f32 mismatch"

    # 3) Default generation-aware path (bf16 tanh/MXU on v6e/v7x, f32 on v5e).
    N3 = 300
    x3 = jax.random.normal(kx, (N3, 2), jnp.float32)
    t3 = jax.random.uniform(kt, (N3, 1), jnp.float32)
    out3 = jax.block_until_ready(vector_field_forward(x3, t3, params))
    ref3 = reference_forward(x3, t3, params)
    assert out3.shape == (N3, OUT_DIM)
    assert jnp.allclose(out3, ref3, atol=5e-2, rtol=5e-2), "default-path mismatch"

    print("KERNEL_OK")
</pallas_src>

<mosaic_0001>
module attributes {stable_mosaic.version = 11 : i64} {
  func.func @_mlp_kernel(%arg0: i32, %arg1: memref<8x128xf32, #tpu.memory_space<vmem>>, %arg2: memref<64x8xf32, #tpu.memory_space<vmem>>, %arg3: memref<64x1xf32, #tpu.memory_space<vmem>>, %arg4: memref<64x64xf32, #tpu.memory_space<vmem>>, %arg5: memref<64x1xf32, #tpu.memory_space<vmem>>, %arg6: memref<2x64xf32, #tpu.memory_space<vmem>>, %arg7: memref<2x1xf32, #tpu.memory_space<vmem>>, %arg8: memref<2x128xf32, #tpu.memory_space<vmem>>) attributes {dimension_semantics = [#tpu.dimension_semantics<parallel>], iteration_bounds = array<i64: 1>, scalar_prefetch = 0 : i64, scratch_operands = 0 : i64, tpu.core_type = #tpu.core_type<tc>, window_params = [{transform_indices = @transform_0, window_bounds = array<i64: 8, 128>}, {pipeline_mode = #tpu.pipeline_mode<synchronous>, transform_indices = @transform_1, window_bounds = array<i64: 64, 8>}, {pipeline_mode = #tpu.pipeline_mode<synchronous>, transform_indices = @transform_2, window_bounds = array<i64: 64, 1>}, {pipeline_mode = #tpu.pipeline_mode<synchronous>, transform_indices = @transform_3, window_bounds = array<i64: 64, 64>}, {pipeline_mode = #tpu.pipeline_mode<synchronous>, transform_indices = @transform_4, window_bounds = array<i64: 64, 1>}, {pipeline_mode = #tpu.pipeline_mode<synchronous>, transform_indices = @transform_5, window_bounds = array<i64: 2, 64>}, {pipeline_mode = #tpu.pipeline_mode<synchronous>, transform_indices = @transform_6, window_bounds = array<i64: 2, 1>}, {transform_indices = @transform_7, window_bounds = array<i64: 2, 128>}]} {
    %c0 = arith.constant 0 : index
    %c0_0 = arith.constant 0 : index
    %0 = vector.load %arg1[%c0, %c0_0] : memref<8x128xf32, #tpu.memory_space<vmem>>, vector<8x128xf32>
    %c0_1 = arith.constant 0 : index
    %c0_2 = arith.constant 0 : index
    %1 = vector.load %arg2[%c0_1, %c0_2] : memref<64x8xf32, #tpu.memory_space<vmem>>, vector<64x8xf32>
    %cst = arith.constant dense<0.000000e+00> : vector<64x128xf32>
    %2 = tpu.matmul %1, %0, %cst {dimension_numbers = #tpu.dot_dimension_numbers<[1], [0], [0], [1], [0, 0, 1, 1], [], []>} : vector<64x8xf32>, vector<8x128xf32>, vector<64x128xf32> -> vector<64x128xf32>
    %c0_3 = arith.constant 0 : index
    %c0_4 = arith.constant 0 : index
    %3 = vector.load %arg3[%c0_3, %c0_4] : memref<64x1xf32, #tpu.memory_space<vmem>>, vector<64x1xf32>
    %4 = vector.broadcast %3 : vector<64x1xf32> to vector<64x128xf32>
    %5 = arith.addf %2, %4 : vector<64x128xf32>
    %6 = math.tanh %5 : vector<64x128xf32>
    %c0_5 = arith.constant 0 : index
    %c0_6 = arith.constant 0 : index
    %7 = vector.load %arg4[%c0_5, %c0_6] : memref<64x64xf32, #tpu.memory_space<vmem>>, vector<64x64xf32>
    %cst_7 = arith.constant dense<0.000000e+00> : vector<64x128xf32>
    %8 = tpu.matmul %7, %6, %cst_7 {dimension_numbers = #tpu.dot_dimension_numbers<[1], [0], [0], [1], [0, 0, 1, 1], [], []>} : vector<64x64xf32>, vector<64x128xf32>, vector<64x128xf32> -> vector<64x128xf32>
    %c0_8 = arith.constant 0 : index
    %c0_9 = arith.constant 0 : index
    %9 = vector.load %arg5[%c0_8, %c0_9] : memref<64x1xf32, #tpu.memory_space<vmem>>, vector<64x1xf32>
    %10 = vector.broadcast %9 : vector<64x1xf32> to vector<64x128xf32>
    %11 = arith.addf %8, %10 : vector<64x128xf32>
    %12 = math.tanh %11 : vector<64x128xf32>
    %c0_10 = arith.constant 0 : index
    %c0_11 = arith.constant 0 : index
    %13 = vector.load %arg6[%c0_10, %c0_11] : memref<2x64xf32, #tpu.memory_space<vmem>>, vector<2x64xf32>
    %cst_12 = arith.constant dense<0.000000e+00> : vector<2x128xf32>
    %14 = tpu.matmul %13, %12, %cst_12 {dimension_numbers = #tpu.dot_dimension_numbers<[1], [0], [0], [1], [0, 0, 1, 1], [], []>} : vector<2x64xf32>, vector<64x128xf32>, vector<2x128xf32> -> vector<2x128xf32>
    %c0_13 = arith.constant 0 : index
    %c0_14 = arith.constant 0 : index
    %15 = vector.load %arg7[%c0_13, %c0_14] : memref<2x1xf32, #tpu.memory_space<vmem>>, vector<2x1xf32>
    %16 = vector.broadcast %15 : vector<2x1xf32> to vector<2x128xf32>
    %17 = arith.addf %14, %16 : vector<2x128xf32>
    %c0_15 = arith.constant 0 : index
    %c0_16 = arith.constant 0 : index
    %18 = vector.load %arg8[%c0_15, %c0_16] : memref<2x128xf32, #tpu.memory_space<vmem>>, vector<2x128xf32>
    tpu.vector_store %arg8[%c0_15, %c0_16], %17 {strides = array<i32>} : memref<2x128xf32, #tpu.memory_space<vmem>>, vector<2x128xf32>,
    return
  }
  func.func @transform_0(%arg0: i32) -> (i32, i32) {
    %c0_i32 = arith.constant 0 : i32
    %c0_i32_0 = arith.constant 0 : i32
    return %c0_i32, %arg0 : i32, i32
  }
  func.func @transform_1(%arg0: i32) -> (i32, i32) {
    %c0_i32 = arith.constant 0 : i32
    %c0_i32_0 = arith.constant 0 : i32
    %c0_i32_1 = arith.constant 0 : i32
    return %c0_i32, %c0_i32_0 : i32, i32
  }
  func.func @transform_2(%arg0: i32) -> (i32, i32) {
    %c0_i32 = arith.constant 0 : i32
    %c0_i32_0 = arith.constant 0 : i32
    %c0_i32_1 = arith.constant 0 : i32
    return %c0_i32, %c0_i32_0 : i32, i32
  }
  func.func @transform_3(%arg0: i32) -> (i32, i32) {
    %c0_i32 = arith.constant 0 : i32
    %c0_i32_0 = arith.constant 0 : i32
    %c0_i32_1 = arith.constant 0 : i32
    return %c0_i32, %c0_i32_0 : i32, i32
  }
  func.func @transform_4(%arg0: i32) -> (i32, i32) {
    %c0_i32 = arith.constant 0 : i32
    %c0_i32_0 = arith.constant 0 : i32
    %c0_i32_1 = arith.constant 0 : i32
    return %c0_i32, %c0_i32_0 : i32, i32
  }
  func.func @transform_5(%arg0: i32) -> (i32, i32) {
    %c0_i32 = arith.constant 0 : i32
    %c0_i32_0 = arith.constant 0 : i32
    %c0_i32_1 = arith.constant 0 : i32
    return %c0_i32, %c0_i32_0 : i32, i32
  }
  func.func @transform_6(%arg0: i32) -> (i32, i32) {
    %c0_i32 = arith.constant 0 : i32
    %c0_i32_0 = arith.constant 0 : i32
    %c0_i32_1 = arith.constant 0 : i32
    return %c0_i32, %c0_i32_0 : i32, i32
  }
  func.func @transform_7(%arg0: i32) -> (i32, i32) {
    %c0_i32 = arith.constant 0 : i32
    %c0_i32_0 = arith.constant 0 : i32
    return %c0_i32, %arg0 : i32, i32
  }
}

</mosaic_0001>

<llo_original>
// kernel: _forward.1
$region0: #{_forward.1}
  #allocation0 [shape = 'u32[]', space=smem, size = 0x4, offset = 0x4, fixed_abs, tag = 'smem constant byte address 0x4 - core index']
  #allocation1 [shape = 'u32[144,128]{1,0:T(1,128)}', space=vmem, size = 0x12000, scoped, tag = 'internal scratch']
  %s0 = inlined_call_operand.vmem [shape: f32[8,128], index: 0, kind: input, shape index: {}]
  %s1 = inlined_call_operand.vmem [shape: f32[64,8], index: 1, kind: input, shape index: {}]
  %s2 = inlined_call_operand.vmem [shape: f32[64,1], index: 2, kind: input, shape index: {}]
  %s3 = inlined_call_operand.vmem [shape: f32[64,64], index: 3, kind: input, shape index: {}]
  %s4 = inlined_call_operand.vmem [shape: f32[64,1], index: 4, kind: input, shape index: {}]
  %s5 = inlined_call_operand.vmem [shape: f32[2,64], index: 5, kind: input, shape index: {}]
  %s6 = inlined_call_operand.vmem [shape: f32[2,1], index: 6, kind: input, shape index: {}]
  %s7 = inlined_call_operand.vmem [shape: f32[2,128], index: 7, kind: output, shape index: {}]
  %s8 = sld [smem:[#allocation0]]
  $region38: #{_forward.1} parent=0
    _
  %s10 = ssub.s32 1, %s8
  %s11 = scalar_select 0, %s10, %s8
  // Predicated region
  $region2: #{_forward.1} parent=0 // pred_check
    _
  $region3: #{_forward.1} parent=0 // pred_check_branch
    %13 = sbr.rel (0) target = $region5
  $region4: #{_forward.1} parent=0 // pred_region
    _
  $region5: #{_forward.1} parent=0 // pred_fallthru
    _
  // Predicated region
  $region6: #{_forward.1} parent=0 // pred_check
    _
  $region7: #{_forward.1} parent=0 // pred_check_branch
    %15 = sbr.rel (0) target = $region9
  $region8: #{_forward.1} parent=0 // pred_region
    _
  $region9: #{_forward.1} parent=0 // pred_fallthru
    _
  // Predicated region
  $region10: #{_forward.1} parent=0 // pred_check
    _
  $region11: #{_forward.1} parent=0 // pred_check_branch
    %17 = sbr.rel (0) target = $region13
  $region12: #{_forward.1} parent=0 // pred_region
    _
  $region13: #{_forward.1} parent=0 // pred_fallthru
    _
  // Predicated region
  $region14: #{_forward.1} parent=0 // pred_check
    _
  $region15: #{_forward.1} parent=0 // pred_check_branch
    %19 = sbr.rel (0) target = $region17
  $region16: #{_forward.1} parent=0 // pred_region
    _
  $region17: #{_forward.1} parent=0 // pred_fallthru
    _
  // Predicated region
  $region18: #{_forward.1} parent=0 // pred_check
    _
  $region19: #{_forward.1} parent=0 // pred_check_branch
    %21 = sbr.rel (0) target = $region21
  $region20: #{_forward.1} parent=0 // pred_region
    _
  $region21: #{_forward.1} parent=0 // pred_fallthru
    _
  // Predicated region
  $region22: #{_forward.1} parent=0 // pred_check
    _
  $region23: #{_forward.1} parent=0 // pred_check_branch
    %23 = sbr.rel (0) target = $region25
  $region24: #{_forward.1} parent=0 // pred_region
    _
  $region25: #{_forward.1} parent=0 // pred_fallthru
    _
  // Predicated region
  $region26: #{_forward.1} parent=0 // pred_check
    _
  $region27: #{_forward.1} parent=0 // pred_check_branch
    %25 = sbr.rel (0) target = $region29
  $region28: #{_forward.1} parent=0 // pred_region
    _
  $region29: #{_forward.1} parent=0 // pred_fallthru
    _
  %v26 = vld [vmem:[%s0] sm:$0xff]
  %v27 = vld [vmem:[%s1] sm:$0xff]
  %v28 = vld [vmem:[%s1 + $0x8] sm:$0xff]
  %v29 = vld [vmem:[%s1 + $0x10] sm:$0xff]
  %v30 = vld [vmem:[%s1 + $0x18] sm:$0xff]
  %v31 = vld [vmem:[%s1 + $0x20] sm:$0xff]
  %v32 = vld [vmem:[%s1 + $0x28] sm:$0xff]
  %v33 = vld [vmem:[%s1 + $0x30] sm:$0xff]
  %v34 = vld [vmem:[%s1 + $0x38] sm:$0xff]
  %v35 = vld [vmem:[%s2] sm:$0xff]
  %v36 = vld [vmem:[%s2 + $0x8] sm:$0xff]
  %v37 = vld [vmem:[%s2 + $0x10] sm:$0xff]
  %v38 = vld [vmem:[%s2 + $0x18] sm:$0xff]
  %v39 = vld [vmem:[%s2 + $0x20] sm:$0xff]
  %v40 = vld [vmem:[%s2 + $0x28] sm:$0xff]
  %v41 = vld [vmem:[%s2 + $0x30] sm:$0xff]
  %v42 = vld [vmem:[%s2 + $0x38] sm:$0xff]
  %44 = vset.pattern.permute.xlu0 0
  %45 = vperm.xlu0 %44, %v35
  %v46 = vpop.permute.xlu0 %45
  %49 = vset.pattern.permute.xlu0 0
  %50 = vperm.xlu0 %49, %v36
  %v51 = vpop.permute.xlu0 %50
  %54 = vset.pattern.permute.xlu0 0
  %55 = vperm.xlu0 %54, %v37
  %v56 = vpop.permute.xlu0 %55
  %59 = vset.pattern.permute.xlu0 0
  %60 = vperm.xlu0 %59, %v38
  %v61 = vpop.permute.xlu0 %60
  %64 = vset.pattern.permute.xlu0 0
  %65 = vperm.xlu0 %64, %v39
  %v66 = vpop.permute.xlu0 %65
  %69 = vset.pattern.permute.xlu0 0
  %70 = vperm.xlu0 %69, %v40
  %v71 = vpop.permute.xlu0 %70
  %74 = vset.pattern.permute.xlu0 0
  %75 = vperm.xlu0 %74, %v41
  %v76 = vpop.permute.xlu0 %75
  %79 = vset.pattern.permute.xlu0 0
  %80 = vperm.xlu0 %79, %v42
  %v81 = vpop.permute.xlu0 %80
  %vm83 = vcmask 64512
  %v85 = vsel %vm83, %v27, 0
  %v88 = vsel %vm83, %v28, 0
  %v91 = vsel %vm83, %v29, 0
  %v94 = vsel %vm83, %v30, 0
  %v97 = vsel %vm83, %v31, 0
  %v100 = vsel %vm83, %v32, 0
  %v103 = vsel %vm83, %v33, 0
  %v106 = vsel %vm83, %v34, 0
  %108 = vmatprep.subr.mxu0 0.0
  %109 = vmatpush1.msra.mxu0 %v26
  %110 = vmatprep.subr.mxu0 0.0
  %111 = vmatpush1.msra.mxu0 0.0
  %112 = vmatprep.subr.mxu0 0.0
  %113 = vmatpush1.msra.mxu0 0.0
  %114 = vmatprep.subr.mxu0 0.0
  %115 = vmatpush1.msra.mxu0 0.0
  %116 = vmatprep.subr.mxu0 0.0
  %117 = vmatpush1.msra.mxu0 0.0
  %118 = vmatprep.subr.mxu0 0.0
  %119 = vmatpush1.msra.mxu0 0.0
  %120 = vmatprep.subr.mxu0 0.0
  %121 = vmatpush1.msra.mxu0 0.0
  %122 = vmatprep.subr.mxu0 0.0
  %123 = vmatpush1.msra.mxu0 0.0
  %124 = vmatprep.subr.mxu0 0.0
  %125 = vmatpush1.msra.mxu0 0.0
  %126 = vmatprep.subr.mxu0 0.0
  %127 = vmatpush1.msra.mxu0 0.0
  %128 = vmatprep.subr.mxu0 0.0
  %129 = vmatpush1.msra.mxu0 0.0
  %130 = vmatprep.subr.mxu0 0.0
  %131 = vmatpush1.msra.mxu0 0.0
  %132 = vmatprep.subr.mxu0 0.0
  %133 = vmatpush1.msra.mxu0 0.0
  %134 = vmatprep.subr.mxu0 0.0
  %135 = vmatpush1.msra.mxu0 0.0
  %136 = vmatprep.subr.mxu0 0.0
  %137 = vmatpush1.msra.mxu0 0.0
  %138 = vmatprep.subr.mxu0 0.0
  %139 = vmatpush1.msra.mxu0 0.0
  %140 = vmatprep.subr.mxu0 0.0
  %141 = vmatpush1.msra.mxu0 0.0
  %142 = vmatprep.subr.mxu0 0.0
  %143 = vmatpush1.msra.mxu0 0.0
  %144 = vmatprep.subr.mxu0 0.0
  %145 = vmatpush1.msra.mxu0 0.0
  %146 = vmatprep.subr.mxu0 0.0
  %147 = vmatpush1.msra.mxu0 0.0
  %148 = vmatprep.subr.mxu0 0.0
  %149 = vmatpush1.msra.mxu0 0.0
  %150 = vmatprep.subr.mxu0 0.0
  %151 = vmatpush1.msra.mxu0 0.0
  %152 = vmatprep.subr.mxu0 0.0
  %153 = vmatpush1.msra.mxu0 0.0
  %154 = vmatprep.subr.mxu0 0.0
  %155 = vmatpush1.msra.mxu0 0.0
  %156 = vmatprep.subr.mxu0 0.0
  %157 = vmatpush1.msra.mxu0 0.0
  %158 = vmatprep.subr.mxu0 0.0
  %159 = vmatpush1.msra.mxu0 0.0
  %160 = vmatprep.subr.mxu0 0.0
  %161 = vmatpush1.msra.mxu0 0.0
  %162 = vmatprep.subr.mxu0 0.0
  %163 = vmatpush1.msra.mxu0 0.0
  %164 = vmatprep.subr.mxu0 0.0
  %165 = vmatpush1.msra.mxu0 0.0
  %166 = vmatprep.subr.mxu0 0.0
  %167 = vmatpush1.msra.mxu0 0.0
  %168 = vmatprep.subr.mxu0 0.0
  %169 = vmatpush1.msra.mxu0 0.0
  %170 = vmatprep.subr.mxu0 0.0
  %171 = vmatpush1.msra.mxu0 0.0
  %172 = vmatprep.mubr.f32.mxu0 0.0
  %173 = vmatmul.mubr.f32.gmra.mrb[0].mxu0 %v85
  %v174 = vpop.f32.mrb[0].mxu0
  %v175 = vadd.f32 %v46, %v174
  %v176 = vpop.f32.mrb[0].mxu0
  %177 = vmatprep.mubr.f32.mxu0 0.0
  %178 = vmatmul.mubr.f32.gmra.mrb[0].mxu0 %v88
  %v179 = vpop.f32.mrb[0].mxu0
  %v180 = vadd.f32 %v51, %v179
  %v181 = vpop.f32.mrb[0].mxu0
  %182 = vmatprep.mubr.f32.mxu0 0.0
  %183 = vmatmul.mubr.f32.gmra.mrb[0].mxu0 %v91
  %v184 = vpop.f32.mrb[0].mxu0
  %v185 = vadd.f32 %v56, %v184
  %v186 = vpop.f32.mrb[0].mxu0
  %187 = vmatprep.mubr.f32.mxu0 0.0
  %188 = vmatmul.mubr.f32.gmra.mrb[0].mxu0 %v94
  %v189 = vpop.f32.mrb[0].mxu0
  %v190 = vadd.f32 %v61, %v189
  %v191 = vpop.f32.mrb[0].mxu0
  %192 = vmatprep.mubr.f32.mxu0 0.0
  %193 = vmatmul.mubr.f32.gmra.mrb[0].mxu0 %v97
  %v194 = vpop.f32.mrb[0].mxu0
  %v195 = vadd.f32 %v66, %v194
  %v196 = vpop.f32.mrb[0].mxu0
  %197 = vmatprep.mubr.f32.mxu0 0.0
  %198 = vmatmul.mubr.f32.gmra.mrb[0].mxu0 %v100
  %v199 = vpop.f32.mrb[0].mxu0
  %v200 = vadd.f32 %v71, %v199
  %v201 = vpop.f32.mrb[0].mxu0
  %202 = vmatprep.mubr.f32.mxu0 0.0
  %203 = vmatmul.mubr.f32.gmra.mrb[0].mxu0 %v103
  %v204 = vpop.f32.mrb[0].mxu0
  %v205 = vadd.f32 %v76, %v204
  %v206 = vpop.f32.mrb[0].mxu0
  %207 = vmatprep.mubr.f32.mxu0 0.0
  %208 = vmatmul.mubr.f32.gmra.mrb[0].mxu0 %v106
  %v209 = vpop.f32.mrb[0].mxu0
  %v210 = vadd.f32 %v81, %v209
  %v211 = vpop.f32.mrb[0].mxu0
  %212 = vdwg.mxu0
  %v213 = vtanh.pop %v175
  %v214 = vtanh.pop %v180
  %v215 = vtanh.pop %v185
  %v216 = vtanh.pop %v190
  %v217 = vtanh.pop %v195
  %v218 = vtanh.pop %v200
  %v219 = vtanh.pop %v205
  %v220 = vtanh.pop %v210
  %v221 = vld [vmem:[%s3] sm:$0xff]
  %v222 = vld [vmem:[%s3 + $0x8] sm:$0xff]
  %v223 = vld [vmem:[%s3 + $0x10] sm:$0xff]
  %v224 = vld [vmem:[%s3 + $0x18] sm:$0xff]
  %v225 = vld [vmem:[%s3 + $0x20] sm:$0xff]
  %v226 = vld [vmem:[%s3 + $0x28] sm:$0xff]
  %v227 = vld [vmem:[%s3 + $0x30] sm:$0xff]
  %v228 = vld [vmem:[%s3 + $0x38] sm:$0xff]
  %v229 = vld [vmem:[%s4] sm:$0xff]
  %v230 = vld [vmem:[%s4 + $0x8] sm:$0xff]
  %v231 = vld [vmem:[%s4 + $0x10] sm:$0xff]
  %v232 = vld [vmem:[%s4 + $0x18] sm:$0xff]
  %v233 = vld [vmem:[%s4 + $0x20] sm:$0xff]
  %v234 = vld [vmem:[%s4 + $0x28] sm:$0xff]
  %v235 = vld [vmem:[%s4 + $0x30] sm:$0xff]
  %v236 = vld [vmem:[%s4 + $0x38] sm:$0xff]
  %238 = vset.pattern.permute.xlu0 0
  %239 = vperm.xlu0 %238, %v229
  %v240 = vpop.permute.xlu0 %239
  %243 = vset.pattern.permute.xlu0 0
  %244 = vperm.xlu0 %243, %v230
  %v245 = vpop.permute.xlu0 %244
  %248 = vset.pattern.permute.xlu0 0
  %249 = vperm.xlu0 %248, %v231
  %v250 = vpop.permute.xlu0 %249
  %253 = vset.pattern.permute.xlu0 0
  %254 = vperm.xlu0 %253, %v232
  %v255 = vpop.permute.xlu0 %254
  %258 = vset.pattern.permute.xlu0 0
  %259 = vperm.xlu0 %258, %v233
  %v260 = vpop.permute.xlu0 %259
  %263 = vset.pattern.permute.xlu0 0
  %264 = vperm.xlu0 %263, %v234
  %v265 = vpop.permute.xlu0 %264
  %268 = vset.pattern.permute.xlu0 0
  %269 = vperm.xlu0 %268, %v235
  %v270 = vpop.permute.xlu0 %269
  %273 = vset.pattern.permute.xlu0 0
  %274 = vperm.xlu0 %273, %v236
  %v275 = vpop.permute.xlu0 %274
  %vm277 = vcmask 523264
  %v279 = vsel %vm277, %v221, 0
  %v282 = vsel %vm277, %v222, 0
  %v285 = vsel %vm277, %v223, 0
  %v288 = vsel %vm277, %v224, 0
  %v291 = vsel %vm277, %v225, 0
  %v294 = vsel %vm277, %v226, 0
  %v297 = vsel %vm277, %v227, 0
  %v300 = vsel %vm277, %v228, 0
  %302 = vmatprep.subr.mxu0 0.0
  %303 = vmatpush1.msra.mxu0 %v213
  %304 = vmatprep.subr.mxu0 0.0
  %305 = vmatpush1.msra.mxu0 %v214
  %306 = vmatprep.subr.mxu0 0.0
  %307 = vmatpush1.msra.mxu0 %v215
  %308 = vmatprep.subr.mxu0 0.0
  %309 = vmatpush1.msra.mxu0 %v216
  %310 = vmatprep.subr.mxu0 0.0
  %311 = vmatpush1.msra.mxu0 %v217
  %312 = vmatprep.subr.mxu0 0.0
  %313 = vmatpush1.msra.mxu0 %v218
  %314 = vmatprep.subr.mxu0 0.0
  %315 = vmatpush1.msra.mxu0 %v219
  %316 = vmatprep.subr.mxu0 0.0
  %317 = vmatpush1.msra.mxu0 %v220
  %318 = vmatprep.subr.mxu0 0.0
  %319 = vmatpush1.msra.mxu0 0.0
  %320 = vmatprep.subr.mxu0 0.0
  %321 = vmatpush1.msra.mxu0 0.0
  %322 = vmatprep.subr.mxu0 0.0
  %323 = vmatpush1.msra.mxu0 0.0
  %324 = vmatprep.subr.mxu0 0.0
  %325 = vmatpush1.msra.mxu0 0.0
  %326 = vmatprep.subr.mxu0 0.0
  %327 = vmatpush1.msra.mxu0 0.0
  %328 = vmatprep.subr.mxu0 0.0
  %329 = vmatpush1.msra.mxu0 0.0
  %330 = vmatprep.subr.mxu0 0.0
  %331 = vmatpush1.msra.mxu0 0.0
  %332 = vmatprep.subr.mxu0 0.0
  %333 = vmatpush1.msra.mxu0 0.0
  %334 = vmatprep.subr.mxu0 0.0
  %335 = vmatpush1.msra.mxu0 0.0
  %336 = vmatprep.subr.mxu0 0.0
  %337 = vmatpush1.msra.mxu0 0.0
  %338 = vmatprep.subr.mxu0 0.0
  %339 = vmatpush1.msra.mxu0 0.0
  %340 = vmatprep.subr.mxu0 0.0
  %341 = vmatpush1.msra.mxu0 0.0
  %342 = vmatprep.subr.mxu0 0.0
  %343 = vmatpush1.msra.mxu0 0.0
  %344 = vmatprep.subr.mxu0 0.0
  %345 = vmatpush1.msra.mxu0 0.0
  %346 = vmatprep.subr.mxu0 0.0
  %347 = vmatpush1.msra.mxu0 0.0
  %348 = vmatprep.subr.mxu0 0.0
  %349 = vmatpush1.msra.mxu0 0.0
  %350 = vmatprep.subr.mxu0 0.0
  %351 = vmatpush1.msra.mxu0 0.0
  %352 = vmatprep.subr.mxu0 0.0
  %353 = vmatpush1.msra.mxu0 0.0
  %354 = vmatprep.subr.mxu0 0.0
  %355 = vmatpush1.msra.mxu0 0.0
  %356 = vmatprep.subr.mxu0 0.0
  %357 = vmatpush1.msra.mxu0 0.0
  %358 = vmatprep.subr.mxu0 0.0
  %359 = vmatpush1.msra.mxu0 0.0
  %360 = vmatprep.subr.mxu0 0.0
  %361 = vmatpush1.msra.mxu0 0.0
  %362 = vmatprep.subr.mxu0 0.0
  %363 = vmatpush1.msra.mxu0 0.0
  %364 = vmatprep.subr.mxu0 0.0
  %365 = vmatpush1.msra.mxu0 0.0
  %366 = vmatprep.mubr.f32.mxu0 0.0
  %367 = vmatmul.mubr.f32.gmra.mrb[0].mxu0 %v279
  %v368 = vpop.f32.mrb[0].mxu0
  %v369 = vadd.f32 %v240, %v368
  %v370 = vpop.f32.mrb[0].mxu0
  %371 = vmatprep.mubr.f32.mxu0 0.0
  %372 = vmatmul.mubr.f32.gmra.mrb[0].mxu0 %v282
  %v373 = vpop.f32.mrb[0].mxu0
  %v374 = vadd.f32 %v245, %v373
  %v375 = vpop.f32.mrb[0].mxu0
  %376 = vmatprep.mubr.f32.mxu0 0.0
  %377 = vmatmul.mubr.f32.gmra.mrb[0].mxu0 %v285
  %v378 = vpop.f32.mrb[0].mxu0
  %v379 = vadd.f32 %v250, %v378
  %v380 = vpop.f32.mrb[0].mxu0
  %381 = vmatprep.mubr.f32.mxu0 0.0
  %382 = vmatmul.mubr.f32.gmra.mrb[0].mxu0 %v288
  %v383 = vpop.f32.mrb[0].mxu0
  %v384 = vadd.f32 %v255, %v383
  %v385 = vpop.f32.mrb[0].mxu0
  %386 = vmatprep.mubr.f32.mxu0 0.0
  %387 = vmatmul.mubr.f32.gmra.mrb[0].mxu0 %v291
  %v388 = vpop.f32.mrb[0].mxu0
  %v389 = vadd.f32 %v260, %v388
  %v390 = vpop.f32.mrb[0].mxu0
  %391 = vmatprep.mubr.f32.mxu0 0.0
  %392 = vmatmul.mubr.f32.gmra.mrb[0].mxu0 %v294
  %v393 = vpop.f32.mrb[0].mxu0
  %v394 = vadd.f32 %v265, %v393
  %v395 = vpop.f32.mrb[0].mxu0
  %396 = vmatprep.mubr.f32.mxu0 0.0
  %397 = vmatmul.mubr.f32.gmra.mrb[0].mxu0 %v297
  %v398 = vpop.f32.mrb[0].mxu0
  %v399 = vadd.f32 %v270, %v398
  %v400 = vpop.f32.mrb[0].mxu0
  %401 = vmatprep.mubr.f32.mxu0 0.0
  %402 = vmatmul.mubr.f32.gmra.mrb[0].mxu0 %v300
  %v403 = vpop.f32.mrb[0].mxu0
  %v404 = vadd.f32 %v275, %v403
  %v405 = vpop.f32.mrb[0].mxu0
  %406 = vdwg.mxu0
  %v407 = vtanh.pop %v369
  %v408 = vtanh.pop %v374
  %v409 = vtanh.pop %v379
  %v410 = vtanh.pop %v384
  %v411 = vtanh.pop %v389
  %v412 = vtanh.pop %v394
  %v413 = vtanh.pop %v399
  %v414 = vtanh.pop %v404
  %v415 = vld [vmem:[%s5] sm:$0x3]
  %v416 = vld [vmem:[%s6] sm:$0x3]
  %418 = vset.pattern.permute.xlu0 0
  %419 = vperm.xlu0 %418, %v416
  %v420 = vpop.permute.xlu0 %419
  %v423 = vsel %vm277, %v415, 0
  %425 = vmatprep.subr.mxu0 0.0
  %426 = vmatpush1.msra.mxu0 %v407
  %427 = vmatprep.subr.mxu0 0.0
  %428 = vmatpush1.msra.mxu0 %v408
  %429 = vmatprep.subr.mxu0 0.0
  %430 = vmatpush1.msra.mxu0 %v409
  %431 = vmatprep.subr.mxu0 0.0
  %432 = vmatpush1.msra.mxu0 %v410
  %433 = vmatprep.subr.mxu0 0.0
  %434 = vmatpush1.msra.mxu0 %v411
  %435 = vmatprep.subr.mxu0 0.0
  %436 = vmatpush1.msra.mxu0 %v412
  %437 = vmatprep.subr.mxu0 0.0
  %438 = vmatpush1.msra.mxu0 %v413
  %439 = vmatprep.subr.mxu0 0.0
  %440 = vmatpush1.msra.mxu0 %v414
  %441 = vmatprep.subr.mxu0 0.0
  %442 = vmatpush1.msra.mxu0 0.0
  %443 = vmatprep.subr.mxu0 0.0
  %444 = vmatpush1.msra.mxu0 0.0
  %445 = vmatprep.subr.mxu0 0.0
  %446 = vmatpush1.msra.mxu0 0.0
  %447 = vmatprep.subr.mxu0 0.0
  %448 = vmatpush1.msra.mxu0 0.0
  %449 = vmatprep.subr.mxu0 0.0
  %450 = vmatpush1.msra.mxu0 0.0
  %451 = vmatprep.subr.mxu0 0.0
  %452 = vmatpush1.msra.mxu0 0.0
  %453 = vmatprep.subr.mxu0 0.0
  %454 = vmatpush1.msra.mxu0 0.0
  %455 = vmatprep.subr.mxu0 0.0
  %456 = vmatpush1.msra.mxu0 0.0
  %457 = vmatprep.subr.mxu0 0.0
  %458 = vmatpush1.msra.mxu0 0.0
  %459 = vmatprep.subr.mxu0 0.0
  %460 = vmatpush1.msra.mxu0 0.0
  %461 = vmatprep.subr.mxu0 0.0
  %462 = vmatpush1.msra.mxu0 0.0
  %463 = vmatprep.subr.mxu0 0.0
  %464 = vmatpush1.msra.mxu0 0.0
  %465 = vmatprep.subr.mxu0 0.0
  %466 = vmatpush1.msra.mxu0 0.0
  %467 = vmatprep.subr.mxu0 0.0
  %468 = vmatpush1.msra.mxu0 0.0
  %469 = vmatprep.subr.mxu0 0.0
  %470 = vmatpush1.msra.mxu0 0.0
  %471 = vmatprep.subr.mxu0 0.0
  %472 = vmatpush1.msra.mxu0 0.0
  %473 = vmatprep.subr.mxu0 0.0
  %474 = vmatpush1.msra.mxu0 0.0
  %475 = vmatprep.subr.mxu0 0.0
  %476 = vmatpush1.msra.mxu0 0.0
  %477 = vmatprep.subr.mxu0 0.0
  %478 = vmatpush1.msra.mxu0 0.0
  %479 = vmatprep.subr.mxu0 0.0
  %480 = vmatpush1.msra.mxu0 0.0
  %481 = vmatprep.subr.mxu0 0.0
  %482 = vmatpush1.msra.mxu0 0.0
  %483 = vmatprep.subr.mxu0 0.0
  %484 = vmatpush1.msra.mxu0 0.0
  %485 = vmatprep.subr.mxu0 0.0
  %486 = vmatpush1.msra.mxu0 0.0
  %487 = vmatprep.subr.mxu0 0.0
  %488 = vmatpush1.msra.mxu0 0.0
  %489 = vmatprep.mubr.f32.mxu0 0.0
  %490 = vmatmul.mubr.f32.gmra.mrb[0].mxu0 %v423
  %v491 = vpop.f32.mrb[0].mxu0
  %v492 = vadd.f32 %v420, %v491
  %v493 = vpop.f32.mrb[0].mxu0
  %494 = vdwg.mxu0
  %495 = vst [vmem:[%s7] sm:$0x3] %v492
  // Predicated region
  $region30: #{_forward.1} parent=0 // pred_check
    _
  $region31: #{_forward.1} parent=0 // pred_check_branch
    %497 = sbr.rel (0) target = $region33
  $region32: #{_forward.1} parent=0 // pred_region
    _
  $region33: #{_forward.1} parent=0 // pred_fallthru
    _
  // Predicated region
  $region34: #{_forward.1} parent=0 // pred_check
    _
  $region35: #{_forward.1} parent=0 // pred_check_branch
    %499 = sbr.rel (0) target = $region37
  $region36: #{_forward.1} parent=0 // pred_region
    _
  $region37: #{_forward.1} parent=0 // pred_fallthru
    _

</llo_original>
